<compile_context>
chip_gen: v7x
topology: tpu7x:2x2x1
jax: 0.10.0
libtpu: 0.0.40
codegen_flags: <defaults>
</compile_context>

<pallas_src>
import math

import jax
import jax.numpy as jnp
from jax.experimental import pallas as pl
from jax.experimental.pallas import tpu as pltpu


def _cdiv(a, b):
    return (a + b - 1) // b


def _round_up(a, b):
    return _cdiv(a, b) * b


# ---------------------------------------------------------------------------
# Kernel (shared by the single-block fast path and the batch-tiled path).
# Refs: x (TB, E), w1 (4E, E), b1 (4E, 1), w2 (2E, 4E), b2 (2E, 1),
#       w3 (1, 2E) [1/T folded], b3 (1, 1) [1/T folded], out (1, TB).
# ---------------------------------------------------------------------------
def _ebm_kernel(x_ref, w1_ref, b1_ref, w2_ref, b2_ref, w3_ref, b3_ref, o_ref):
    # Layer 1: contract E on both operands (A @ B^T — the attention q@kT
    # pattern), so the batch tile lands on the lane axis of h1.
    h1 = jax.lax.dot_general(
        w1_ref[...], x_ref[...].astype(w1_ref.dtype),
        dimension_numbers=(((1,), (1,)), ((), ())),
        preferred_element_type=jnp.float32)                    # (4E, TB) f32
    h1 = jnp.maximum(h1 + b1_ref[...], 0.0)

    # Layer 2: plain MXU matmul, N = TB lane-dense.
    h2 = jnp.dot(w2_ref[...], h1.astype(w2_ref.dtype),
                 preferred_element_type=jnp.float32)           # (2E, TB) f32
    h2 = jnp.maximum(h2 + b2_ref[...], 0.0)

    # Layer 3: (1, 2E) @ (2E, TB) -> lane-dense (1, TB) energy row.
    # 1/temperature is already folded into w3_ref / b3_ref by prepare_params.
    o_ref[...] = (jnp.dot(w3_ref[...], h2,
                          preferred_element_type=jnp.float32) + b3_ref[...])


# ---------------------------------------------------------------------------
# Parameter handling
# ---------------------------------------------------------------------------
def _xavier_uniform(key, shape, gain):
    # shape = (out_features, in_features), matching torch nn.Linear.weight
    fan_out, fan_in = shape
    bound = gain * math.sqrt(6.0 / (fan_in + fan_out))
    return jax.random.uniform(key, shape, dtype=jnp.float32,
                              minval=-bound, maxval=bound)


def init_ebm_params(key, embedding_dim, gain=0.01):
    """Torch-layout params: weights (out, in), biases (out,). Biases zero."""
    k1, k2, k3 = jax.random.split(key, 3)
    e = embedding_dim
    w1 = _xavier_uniform(k1, (4 * e, e), gain)
    b1 = jnp.zeros((4 * e,), jnp.float32)
    w2 = _xavier_uniform(k2, (2 * e, 4 * e), gain)
    b2 = jnp.zeros((2 * e,), jnp.float32)
    w3 = _xavier_uniform(k3, (1, 2 * e), gain)
    b3 = jnp.zeros((1,), jnp.float32)
    return (w1, b1, w2, b2, w3, b3)


def prepare_params(params, temperature=0.7, compute_dtype=jnp.float32):
    """One-time prep outside the hot path:
       - weights stay in (out, in) layout for the batch-on-lanes kernel
       - biases become (out, 1) columns (f32 epilogue on every generation)
       - 1/temperature folded into the final weight row and bias
       - the two big matmul weights cast to compute_dtype (bf16 is fine on
         v5e/v6e/v7x: the MXU is bf16-native everywhere, only the f32
         epilogue touches the VPU)."""
    w1, b1, w2, b2, w3, b3 = params
    inv_t = 1.0 / float(temperature)
    return (
        w1.astype(compute_dtype),                           # (4E, E)
        b1.reshape(-1, 1).astype(jnp.float32),              # (4E, 1)
        w2.astype(compute_dtype),                           # (2E, 4E)
        b2.reshape(-1, 1).astype(jnp.float32),              # (2E, 1)
        (w3.reshape(1, -1) * inv_t).astype(jnp.float32),    # (1, 2E), 1/T folded
        (b3.reshape(1, 1) * inv_t).astype(jnp.float32),     # (1, 1),  1/T folded
    )


# ---------------------------------------------------------------------------
# VMEM budgeting
# ---------------------------------------------------------------------------
def _vmem_capacity_bytes():
    try:
        return int(pltpu.get_tpu_info().vmem_capacity_bytes)
    except Exception:
        return 64 << 20            # conservative fallback: v7x per-TC VMEM


def _vmem_estimate(tb, e, compute_dtype, x_dtype):
    cb = jnp.dtype(compute_dtype).itemsize
    xb = jnp.dtype(x_dtype).itemsize
    w_bytes = (4 * e * e + 2 * e * 4 * e) * cb               # w1, w2 (single-buffered)
    w_bytes += (4 * e + 2 * e + 2 * e + 1) * 4               # b1, b2, w3, b3 (f32)
    x_tiles = 2 * tb * e * xb                                # double-buffered x tile
    out_tiles = 2 * tb * 4                                   # double-buffered out row
    acts = tb * (4 * e + 2 * e) * 4                          # h1T, h2T in f32
    return w_bytes + x_tiles + out_tiles + acts + (2 << 20)  # + slack


# ---------------------------------------------------------------------------
# Forward wrapper
# ---------------------------------------------------------------------------
def ebm_forward(x, prepared_params, *, block_batch=1024):
    """x: (batch, embedding_dim) f32 or bf16.  Returns energy: (batch,) f32."""
    w1p, b1p, w2p, b2p, w3p, b3p = prepared_params
    batch, e = x.shape

    # ---- fast path: tiny batch, single block, no grid/pipeline overhead ----
    if batch <= 256:
        bp = _round_up(batch, 128)          # tiny pad -> lane-aligned matmul N
        x_fp = x if bp == batch else jnp.pad(x, ((0, bp - batch), (0, 0)))
        vmem = pl.BlockSpec(memory_space=pltpu.MemorySpace.VMEM)
        out = pl.pallas_call(
            _ebm_kernel,
            out_shape=jax.ShapeDtypeStruct((1, bp), jnp.float32),
            in_specs=[vmem] * 7,
            out_specs=vmem,
        )(x_fp, w1p, b1p, w2p, b2p, w3p, b3p)
        return out[0, :batch]

    # ---- tiled path: large batch tiles, resident weights, pipelined x ------
    # Keep >= 2 grid steps so the "parallel" axis can shard across v7x's two
    # TensorCores; round to a multiple of 128 for lane-dense output rows.
    tb = max(128, min(int(block_batch), _round_up(_cdiv(batch, 2), 128)))

    cap = _vmem_capacity_bytes()
    budget = min(int(cap * 0.8), cap - (8 << 20))            # leave headroom
    while tb > 128 and _vmem_estimate(tb, e, w1p.dtype, x.dtype) > budget:
        tb //= 2
    est = _vmem_estimate(tb, e, w1p.dtype, x.dtype)
    vmem_limit = None if est <= (16 << 20) else int(min(max(est, 32 << 20), budget))

    n_tiles = _cdiv(batch, tb)
    # No jnp.pad copy of x: the last x block may be ragged; rows are fully
    # independent, and the garbage output lanes are sliced off below.

    def _call(single_buffer_weights):
        def resident(shape):
            # Constant block index -> weights stay VMEM-resident; Buffered(1)
            # avoids allocating a useless second buffer for them.
            if single_buffer_weights:
                return pl.BlockSpec(shape, lambda i: (0, 0),
                                    pipeline_mode=pl.Buffered(1))
            return pl.BlockSpec(shape, lambda i: (0, 0))

        grid_spec = pltpu.PrefetchScalarGridSpec(
            num_scalar_prefetch=0,
            grid=(n_tiles,),
            in_specs=[
                pl.BlockSpec((tb, e), lambda i: (i, 0)),      # x tile (pipelined)
                resident(w1p.shape), resident(b1p.shape),
                resident(w2p.shape), resident(b2p.shape),
                resident(w3p.shape), resident(b3p.shape),
            ],
            out_specs=pl.BlockSpec((1, tb), lambda i: (i, 0)),  # lane-dense row
        )
        return pl.pallas_call(
            _ebm_kernel,
            out_shape=jax.ShapeDtypeStruct((n_tiles, tb), jnp.float32),
            grid_spec=grid_spec,
            compiler_params=pltpu.CompilerParams(
                dimension_semantics=("parallel",),            # megacore on v7x
                vmem_limit_bytes=vmem_limit),
        )(x, w1p, b1p, w2p, b2p, w3p, b3p)

    try:
        out = _call(single_buffer_weights=True)
    except Exception:
        # Older jax: BlockSpec(pipeline_mode=...) / Buffered(1) unsupported.
        out = _call(single_buffer_weights=False)

    return out.reshape(-1)[:batch]


# ---------------------------------------------------------------------------
# Pure-JAX reference (matches the torch module)
# ---------------------------------------------------------------------------
def ebm_reference(x, params, temperature=0.7):
    w1, b1, w2, b2, w3, b3 = params
    h1 = jnp.maximum(x @ w1.T + b1, 0.0)
    h2 = jnp.maximum(h1 @ w2.T + b2, 0.0)
    e = (h2 @ w3.T + b3)[:, 0]
    return e / temperature


if __name__ == "__main__":
    embedding_dim = 32
    temperature = 0.7

    key = jax.random.PRNGKey(0)
    k_params, k_x1, k_x2, k_x3 = jax.random.split(key, 4)

    params = init_ebm_params(k_params, embedding_dim)
    prepared = prepare_params(params, temperature)

    def _norm_err(a, b):
        a = jnp.asarray(a, jnp.float32)
        b = jnp.asarray(b, jnp.float32)
        return float(jnp.max(jnp.abs(a - b)) / (jnp.max(jnp.abs(b)) + 1e-12))

    # 1) Tiny batch -> single-block fast path.
    x_small = jax.random.normal(k_x1, (2, embedding_dim), dtype=jnp.float32)
    e_small = ebm_forward(x_small, prepared)
    jax.block_until_ready(e_small)
    assert e_small.shape == (2,)
    assert _norm_err(e_small, ebm_reference(x_small, params, temperature)) < 1e-4

    # 2) Batch not a multiple of the tile -> tiled path with ragged last block.
    x_big = jax.random.normal(k_x2, (300, embedding_dim), dtype=jnp.float32)
    e_big = ebm_forward(x_big, prepared)
    jax.block_until_ready(e_big)
    assert e_big.shape == (300,)
    assert _norm_err(e_big, ebm_reference(x_big, params, temperature)) < 1e-4

    # 3) Exactly divisible batch, 2 grid steps (v7x megacore-friendly).
    x_mid = jax.random.normal(k_x3, (512, embedding_dim), dtype=jnp.float32)
    e_mid = ebm_forward(x_mid, prepared)
    jax.block_until_ready(e_mid)
    assert e_mid.shape == (512,)
    assert _norm_err(e_mid, ebm_reference(x_mid, params, temperature)) < 1e-4

    # 4) bf16 compute + bf16 x (halves the dominant x DMA); tolerance-checked
    #    against the f32 reference, not just finiteness.
    prepared_bf16 = prepare_params(params, temperature, compute_dtype=jnp.bfloat16)
    e_bf16 = ebm_forward(x_big.astype(jnp.bfloat16), prepared_bf16)
    jax.block_until_ready(e_bf16)
    assert e_bf16.shape == (300,)
    assert bool(jnp.all(jnp.isfinite(e_bf16)))
    assert _norm_err(e_bf16, ebm_reference(x_big, params, temperature)) < 8e-2

    print("KERNEL_OK")
</pallas_src>

<mosaic_0001>
module attributes {stable_mosaic.version = 11 : i64} {
  func.func @_ebm_kernel(%arg0: memref<128x32xf32, #tpu.memory_space<vmem>>, %arg1: memref<128x32xf32, #tpu.memory_space<vmem>>, %arg2: memref<128x1xf32, #tpu.memory_space<vmem>>, %arg3: memref<64x128xf32, #tpu.memory_space<vmem>>, %arg4: memref<64x1xf32, #tpu.memory_space<vmem>>, %arg5: memref<1x64xf32, #tpu.memory_space<vmem>>, %arg6: memref<1x1xf32, #tpu.memory_space<vmem>>, %arg7: memref<1x128xf32, #tpu.memory_space<vmem>>) attributes {dimension_semantics = [], scalar_prefetch = 0 : i64, scratch_operands = 0 : i64, tpu.core_type = #tpu.core_type<tc>} {
    %c0 = arith.constant 0 : index
    %c0_0 = arith.constant 0 : index
    %0 = vector.load %arg1[%c0, %c0_0] : memref<128x32xf32, #tpu.memory_space<vmem>>, vector<128x32xf32>
    %c0_1 = arith.constant 0 : index
    %c0_2 = arith.constant 0 : index
    %1 = vector.load %arg0[%c0_1, %c0_2] : memref<128x32xf32, #tpu.memory_space<vmem>>, vector<128x32xf32>
    %cst = arith.constant dense<0.000000e+00> : vector<128x128xf32>
    %2 = tpu.matmul %0, %1, %cst {dimension_numbers = #tpu.dot_dimension_numbers<[1], [1], [0], [0], [0, 0, 1, 0], [], []>} : vector<128x32xf32>, vector<128x32xf32>, vector<128x128xf32> -> vector<128x128xf32>
    %c0_3 = arith.constant 0 : index
    %c0_4 = arith.constant 0 : index
    %3 = vector.load %arg2[%c0_3, %c0_4] : memref<128x1xf32, #tpu.memory_space<vmem>>, vector<128x1xf32>
    %4 = vector.broadcast %3 : vector<128x1xf32> to vector<128x128xf32>
    %5 = arith.addf %2, %4 : vector<128x128xf32>
    %cst_5 = arith.constant 0.000000e+00 : f32
    %6 = vector.broadcast %cst_5 : f32 to vector<128x128xf32>
    %7 = arith.maximumf %5, %6 : vector<128x128xf32>
    %c0_6 = arith.constant 0 : index
    %c0_7 = arith.constant 0 : index
    %8 = vector.load %arg3[%c0_6, %c0_7] : memref<64x128xf32, #tpu.memory_space<vmem>>, vector<64x128xf32>
    %cst_8 = arith.constant dense<0.000000e+00> : vector<64x128xf32>
    %9 = tpu.matmul %8, %7, %cst_8 {dimension_numbers = #tpu.dot_dimension_numbers<[1], [0], [0], [1], [0, 0, 1, 1], [], []>} : vector<64x128xf32>, vector<128x128xf32>, vector<64x128xf32> -> vector<64x128xf32>
    %c0_9 = arith.constant 0 : index
    %c0_10 = arith.constant 0 : index
    %10 = vector.load %arg4[%c0_9, %c0_10] : memref<64x1xf32, #tpu.memory_space<vmem>>, vector<64x1xf32>
    %11 = vector.broadcast %10 : vector<64x1xf32> to vector<64x128xf32>
    %12 = arith.addf %9, %11 : vector<64x128xf32>
    %cst_11 = arith.constant 0.000000e+00 : f32
    %13 = vector.broadcast %cst_11 : f32 to vector<64x128xf32>
    %14 = arith.maximumf %12, %13 : vector<64x128xf32>
    %c0_12 = arith.constant 0 : index
    %c0_13 = arith.constant 0 : index
    %15 = vector.load %arg5[%c0_12, %c0_13] : memref<1x64xf32, #tpu.memory_space<vmem>>, vector<1x64xf32>
    %cst_14 = arith.constant dense<0.000000e+00> : vector<1x128xf32>
    %16 = tpu.matmul %15, %14, %cst_14 {dimension_numbers = #tpu.dot_dimension_numbers<[1], [0], [0], [1], [0, 0, 1, 1], [], []>} : vector<1x64xf32>, vector<64x128xf32>, vector<1x128xf32> -> vector<1x128xf32>
    %c0_15 = arith.constant 0 : index
    %c0_16 = arith.constant 0 : index
    %17 = vector.load %arg6[%c0_15, %c0_16] : memref<1x1xf32, #tpu.memory_space<vmem>>, vector<1x1xf32>
    %18 = vector.broadcast %17 : vector<1x1xf32> to vector<1x128xf32>
    %19 = arith.addf %16, %18 : vector<1x128xf32>
    %c0_17 = arith.constant 0 : index
    %c0_18 = arith.constant 0 : index
    %20 = vector.load %arg7[%c0_17, %c0_18] : memref<1x128xf32, #tpu.memory_space<vmem>>, vector<1x128xf32>
    tpu.vector_store %arg7[%c0_17, %c0_18], %19 {strides = array<i32>} : memref<1x128xf32, #tpu.memory_space<vmem>>, vector<1x128xf32>,
    return
  }
}

</mosaic_0001>

<llo_original>
// kernel: tpu_custom_call.1
$region0: #{tpu_custom_call.1}
  #allocation0 [shape = 'u32[]', space=smem, size = 0x4, offset = 0x4, fixed_abs, tag = 'smem constant byte address 0x4 - core index']
  #allocation1 [shape = 'u32[144,128]{1,0:T(1,128)}', space=vmem, size = 0x12000, scoped, tag = 'internal scratch']
  #allocation2 [shape = 'f32[1,1]{1,0:T(1,128)S(1)}', space=vmem, size = 0x200, scoped, tag = 'scoped memory for tpu_custom_call.1']
  %s0 = inlined_call_operand.vmem [shape: f32[128,32], index: 0, kind: input, shape index: {}]
  %s1 = inlined_call_operand.vmem [shape: f32[128,32], index: 1, kind: input, shape index: {}]
  %s2 = inlined_call_operand.vmem [shape: f32[128,1], index: 2, kind: input, shape index: {}]
  %s3 = inlined_call_operand.vmem [shape: f32[64,128], index: 3, kind: input, shape index: {}]
  %s4 = inlined_call_operand.vmem [shape: f32[64,1], index: 4, kind: input, shape index: {}]
  %s5 = inlined_call_operand.vmem [shape: f32[1,64], index: 5, kind: input, shape index: {}]
  %s6 = inlined_call_operand.<no memory space> [shape: f32[1,1], index: 6, kind: input, shape index: {}]
  %s7 = inlined_call_operand.hbm [shape: f32[1,128], index: 7, kind: output, shape index: {}]
  %s8 = sld [smem:[#allocation0]]
  $region38: #{tpu_custom_call.1} parent=0
    _
  %s10 = ssub.s32 1, %s8
  %s11 = scalar_select 0, %s10, %s8
  %v12 = vstv %s6
  %13 = vst [vmem:[#allocation2] sm:$0x1] %v12
  $region1: #{tpu_custom_call.1} parent=0
    #allocation3 [shape = 'u8[512]{0}', space=vmem, size = 0x400, scoped, tag = 'output window, operand 0, single buffered']
    #allocation4 [shape = 's32[1]{0}', space=sflag, size = 0x4, scoped, tag = 'scoped memory for tpu_custom_call.1']
    %14 = vsyncpa [#allocation4], 0
    // Predicated region
    $region2: #{tpu_custom_call.1} parent=1 // pred_check
      _
    $region3: #{tpu_custom_call.1} parent=1 // pred_check_branch
      %16 = sbr.rel (0) target = $region5
    $region4: #{tpu_custom_call.1} parent=1 // pred_region
      _
    $region5: #{tpu_custom_call.1} parent=1 // pred_fallthru
      _
    // Predicated region
    $region6: #{tpu_custom_call.1} parent=1 // pred_check
      _
    $region7: #{tpu_custom_call.1} parent=1 // pred_check_branch
      %18 = sbr.rel (0) target = $region9
    $region8: #{tpu_custom_call.1} parent=1 // pred_region
      _
    $region9: #{tpu_custom_call.1} parent=1 // pred_fallthru
      _
    // Predicated region
    $region10: #{tpu_custom_call.1} parent=1 // pred_check
      _
    $region11: #{tpu_custom_call.1} parent=1 // pred_check_branch
      %20 = sbr.rel (0) target = $region13
    $region12: #{tpu_custom_call.1} parent=1 // pred_region
      _
    $region13: #{tpu_custom_call.1} parent=1 // pred_fallthru
      _
    // Predicated region
    $region14: #{tpu_custom_call.1} parent=1 // pred_check
      _
    $region15: #{tpu_custom_call.1} parent=1 // pred_check_branch
      %22 = sbr.rel (0) target = $region17
    $region16: #{tpu_custom_call.1} parent=1 // pred_region
      _
    $region17: #{tpu_custom_call.1} parent=1 // pred_fallthru
      _
    // Predicated region
    $region18: #{tpu_custom_call.1} parent=1 // pred_check
      _
    $region19: #{tpu_custom_call.1} parent=1 // pred_check_branch
      %24 = sbr.rel (0) target = $region21
    $region20: #{tpu_custom_call.1} parent=1 // pred_region
      _
    $region21: #{tpu_custom_call.1} parent=1 // pred_fallthru
      _
    // Predicated region
    $region22: #{tpu_custom_call.1} parent=1 // pred_check
      _
    $region23: #{tpu_custom_call.1} parent=1 // pred_check_branch
      %26 = sbr.rel (0) target = $region25
    $region24: #{tpu_custom_call.1} parent=1 // pred_region
      _
    $region25: #{tpu_custom_call.1} parent=1 // pred_fallthru
      _
    // Predicated region
    $region26: #{tpu_custom_call.1} parent=1 // pred_check
      _
    $region27: #{tpu_custom_call.1} parent=1 // pred_check_branch
      %28 = sbr.rel (0) target = $region29
    $region28: #{tpu_custom_call.1} parent=1 // pred_region
      _
    $region29: #{tpu_custom_call.1} parent=1 // pred_fallthru
      _
    %v29 = vld [vmem:[%s1] sm:$0xff]
    %v30 = vld [vmem:[%s1 + $0x8] sm:$0xff]
    %v31 = vld [vmem:[%s1 + $0x10] sm:$0xff]
    %v32 = vld [vmem:[%s1 + $0x18] sm:$0xff]
    %v33 = vld [vmem:[%s1 + $0x20] sm:$0xff]
    %v34 = vld [vmem:[%s1 + $0x28] sm:$0xff]
    %v35 = vld [vmem:[%s1 + $0x30] sm:$0xff]
    %v36 = vld [vmem:[%s1 + $0x38] sm:$0xff]
    %v37 = vld [vmem:[%s1 + $0x40] sm:$0xff]
    %v38 = vld [vmem:[%s1 + $0x48] sm:$0xff]
    %v39 = vld [vmem:[%s1 + $0x50] sm:$0xff]
    %v40 = vld [vmem:[%s1 + $0x58] sm:$0xff]
    %v41 = vld [vmem:[%s1 + $0x60] sm:$0xff]
    %v42 = vld [vmem:[%s1 + $0x68] sm:$0xff]
    %v43 = vld [vmem:[%s1 + $0x70] sm:$0xff]
    %v44 = vld [vmem:[%s1 + $0x78] sm:$0xff]
    %v45 = vld [vmem:[%s0] sm:$0xff]
    %v46 = vld [vmem:[%s0 + $0x8] sm:$0xff]
    %v47 = vld [vmem:[%s0 + $0x10] sm:$0xff]
    %v48 = vld [vmem:[%s0 + $0x18] sm:$0xff]
    %v49 = vld [vmem:[%s0 + $0x20] sm:$0xff]
    %v50 = vld [vmem:[%s0 + $0x28] sm:$0xff]
    %v51 = vld [vmem:[%s0 + $0x30] sm:$0xff]
    %v52 = vld [vmem:[%s0 + $0x38] sm:$0xff]
    %v53 = vld [vmem:[%s0 + $0x40] sm:$0xff]
    %v54 = vld [vmem:[%s0 + $0x48] sm:$0xff]
    %v55 = vld [vmem:[%s0 + $0x50] sm:$0xff]
    %v56 = vld [vmem:[%s0 + $0x58] sm:$0xff]
    %v57 = vld [vmem:[%s0 + $0x60] sm:$0xff]
    %v58 = vld [vmem:[%s0 + $0x68] sm:$0xff]
    %v59 = vld [vmem:[%s0 + $0x70] sm:$0xff]
    %v60 = vld [vmem:[%s0 + $0x78] sm:$0xff]
    %v61 = vld [vmem:[%s2] sm:$0xff]
    %v62 = vld [vmem:[%s2 + $0x8] sm:$0xff]
    %v63 = vld [vmem:[%s2 + $0x10] sm:$0xff]
    %v64 = vld [vmem:[%s2 + $0x18] sm:$0xff]
    %v65 = vld [vmem:[%s2 + $0x20] sm:$0xff]
    %v66 = vld [vmem:[%s2 + $0x28] sm:$0xff]
    %v67 = vld [vmem:[%s2 + $0x30] sm:$0xff]
    %v68 = vld [vmem:[%s2 + $0x38] sm:$0xff]
    %v69 = vld [vmem:[%s2 + $0x40] sm:$0xff]
    %v70 = vld [vmem:[%s2 + $0x48] sm:$0xff]
    %v71 = vld [vmem:[%s2 + $0x50] sm:$0xff]
    %v72 = vld [vmem:[%s2 + $0x58] sm:$0xff]
    %v73 = vld [vmem:[%s2 + $0x60] sm:$0xff]
    %v74 = vld [vmem:[%s2 + $0x68] sm:$0xff]
    %v75 = vld [vmem:[%s2 + $0x70] sm:$0xff]
    %v76 = vld [vmem:[%s2 + $0x78] sm:$0xff]
    %78 = vset.pattern.permute.xlu0 0
    %79 = vperm.xlu0 %78, %v61
    %v80 = vpop.permute.xlu0 %79
    %83 = vset.pattern.permute.xlu0 0
    %84 = vperm.xlu0 %83, %v62
    %v85 = vpop.permute.xlu0 %84
    %88 = vset.pattern.permute.xlu0 0
    %89 = vperm.xlu0 %88, %v63
    %v90 = vpop.permute.xlu0 %89
    %93 = vset.pattern.permute.xlu0 0
    %94 = vperm.xlu0 %93, %v64
    %v95 = vpop.permute.xlu0 %94
    %98 = vset.pattern.permute.xlu0 0
    %99 = vperm.xlu0 %98, %v65
    %v100 = vpop.permute.xlu0 %99
    %103 = vset.pattern.permute.xlu0 0
    %104 = vperm.xlu0 %103, %v66
    %v105 = vpop.permute.xlu0 %104
    %108 = vset.pattern.permute.xlu0 0
    %109 = vperm.xlu0 %108, %v67
    %v110 = vpop.permute.xlu0 %109
    %113 = vset.pattern.permute.xlu0 0
    %114 = vperm.xlu0 %113, %v68
    %v115 = vpop.permute.xlu0 %114
    %118 = vset.pattern.permute.xlu0 0
    %119 = vperm.xlu0 %118, %v69
    %v120 = vpop.permute.xlu0 %119
    %123 = vset.pattern.permute.xlu0 0
    %124 = vperm.xlu0 %123, %v70
    %v125 = vpop.permute.xlu0 %124
    %128 = vset.pattern.permute.xlu0 0
    %129 = vperm.xlu0 %128, %v71
    %v130 = vpop.permute.xlu0 %129
    %133 = vset.pattern.permute.xlu0 0
    %134 = vperm.xlu0 %133, %v72
    %v135 = vpop.permute.xlu0 %134
    %138 = vset.pattern.permute.xlu0 0
    %139 = vperm.xlu0 %138, %v73
    %v140 = vpop.permute.xlu0 %139
    %143 = vset.pattern.permute.xlu0 0
    %144 = vperm.xlu0 %143, %v74
    %v145 = vpop.permute.xlu0 %144
    %148 = vset.pattern.permute.xlu0 0
    %149 = vperm.xlu0 %148, %v75
    %v150 = vpop.permute.xlu0 %149
    %153 = vset.pattern.permute.xlu0 0
    %154 = vperm.xlu0 %153, %v76
    %v155 = vpop.permute.xlu0 %154
    %vm157 = vcmask 261120
    %v159 = vsel %vm157, %v29, 0
    %v162 = vsel %vm157, %v30, 0
    %v165 = vsel %vm157, %v31, 0
    %v168 = vsel %vm157, %v32, 0
    %v171 = vsel %vm157, %v33, 0
    %v174 = vsel %vm157, %v34, 0
    %v177 = vsel %vm157, %v35, 0
    %v180 = vsel %vm157, %v36, 0
    %v183 = vsel %vm157, %v37, 0
    %v186 = vsel %vm157, %v38, 0
    %v189 = vsel %vm157, %v39, 0
    %v192 = vsel %vm157, %v40, 0
    %v195 = vsel %vm157, %v41, 0
    %v198 = vsel %vm157, %v42, 0
    %v201 = vsel %vm157, %v43, 0
    %v204 = vsel %vm157, %v44, 0
    %v207 = vsel %vm157, %v45, 0
    %v210 = vsel %vm157, %v46, 0
    %v213 = vsel %vm157, %v47, 0
    %v216 = vsel %vm157, %v48, 0
    %v219 = vsel %vm157, %v49, 0
    %v222 = vsel %vm157, %v50, 0
    %v225 = vsel %vm157, %v51, 0
    %v228 = vsel %vm157, %v52, 0
    %v231 = vsel %vm157, %v53, 0
    %v234 = vsel %vm157, %v54, 0
    %v237 = vsel %vm157, %v55, 0
    %v240 = vsel %vm157, %v56, 0
    %v243 = vsel %vm157, %v57, 0
    %v246 = vsel %vm157, %v58, 0
    %v249 = vsel %vm157, %v59, 0
    %v252 = vsel %vm157, %v60, 0
    %254 = vmatprep.subr.mxu0 0.0
    %255 = vmatpush1.xpose.msra.mxu0 %v207
    %256 = vmatprep.subr.mxu0 0.0
    %257 = vmatpush1.xpose.msra.mxu0 %v210
    %258 = vmatprep.subr.mxu0 0.0
    %259 = vmatpush1.xpose.msra.mxu0 %v213
    %260 = vmatprep.subr.mxu0 0.0
    %261 = vmatpush1.xpose.msra.mxu0 %v216
    %262 = vmatprep.subr.mxu0 0.0
    %263 = vmatpush1.xpose.msra.mxu0 %v219
    %264 = vmatprep.subr.mxu0 0.0
    %265 = vmatpush1.xpose.msra.mxu0 %v222
    %266 = vmatprep.subr.mxu0 0.0
    %267 = vmatpush1.xpose.msra.mxu0 %v225
    %268 = vmatprep.subr.mxu0 0.0
    %269 = vmatpush1.xpose.msra.mxu0 %v228
    %270 = vmatprep.subr.mxu0 0.0
    %271 = vmatpush1.xpose.msra.mxu0 %v231
    %272 = vmatprep.subr.mxu0 0.0
    %273 = vmatpush1.xpose.msra.mxu0 %v234
    %274 = vmatprep.subr.mxu0 0.0
    %275 = vmatpush1.xpose.msra.mxu0 %v237
    %276 = vmatprep.subr.mxu0 0.0
    %277 = vmatpush1.xpose.msra.mxu0 %v240
    %278 = vmatprep.subr.mxu0 0.0
    %279 = vmatpush1.xpose.msra.mxu0 %v243
    %280 = vmatprep.subr.mxu0 0.0
    %281 = vmatpush1.xpose.msra.mxu0 %v246
    %282 = vmatprep.subr.mxu0 0.0
    %283 = vmatpush1.xpose.msra.mxu0 %v249
    %284 = vmatprep.subr.mxu0 0.0
    %285 = vmatpush1.xpose.msra.mxu0 %v252
    %286 = vmatprep.subr.mxu0 0.0
    %287 = vmatpush1.xpose.msra.mxu0 0.0
    %288 = vmatprep.subr.mxu0 0.0
    %289 = vmatpush1.xpose.msra.mxu0 0.0
    %290 = vmatprep.subr.mxu0 0.0
    %291 = vmatpush1.xpose.msra.mxu0 0.0
    %292 = vmatprep.subr.mxu0 0.0
    %293 = vmatpush1.xpose.msra.mxu0 0.0
    %294 = vmatprep.subr.mxu0 0.0
    %295 = vmatpush1.xpose.msra.mxu0 0.0
    %296 = vmatprep.subr.mxu0 0.0
    %297 = vmatpush1.xpose.msra.mxu0 0.0
    %298 = vmatprep.subr.mxu0 0.0
    %299 = vmatpush1.xpose.msra.mxu0 0.0
    %300 = vmatprep.subr.mxu0 0.0
    %301 = vmatpush1.xpose.msra.mxu0 0.0
    %302 = vmatprep.subr.mxu0 0.0
    %303 = vmatpush1.xpose.msra.mxu0 0.0
    %304 = vmatprep.subr.mxu0 0.0
    %305 = vmatpush1.xpose.msra.mxu0 0.0
    %306 = vmatprep.subr.mxu0 0.0
    %307 = vmatpush1.xpose.msra.mxu0 0.0
    %308 = vmatprep.subr.mxu0 0.0
    %309 = vmatpush1.xpose.msra.mxu0 0.0
    %310 = vmatprep.subr.mxu0 0.0
    %311 = vmatpush1.xpose.msra.mxu0 0.0
    %312 = vmatprep.subr.mxu0 0.0
    %313 = vmatpush1.xpose.msra.mxu0 0.0
    %314 = vmatprep.subr.mxu0 0.0
    %315 = vmatpush1.xpose.msra.mxu0 0.0
    %316 = vmatprep.subr.mxu0 0.0
    %317 = vmatpush1.xpose.msra.mxu0 0.0
    %318 = vmatprep.mubr.f32.mxu0 0.0
    %319 = vmatmul.mubr.f32.gmra.mrb[0].mxu0 %v159
    %v320 = vpop.f32.mrb[0].mxu0
    %v321 = vadd.f32 %v80, %v320
    %v322 = vpop.f32.mrb[0].mxu0
    %323 = vmatprep.mubr.f32.mxu0 0.0
    %324 = vmatmul.mubr.f32.gmra.mrb[0].mxu0 %v162
    %v325 = vpop.f32.mrb[0].mxu0
    %v326 = vadd.f32 %v85, %v325
    %v327 = vpop.f32.mrb[0].mxu0
    %328 = vmatprep.mubr.f32.mxu0 0.0
    %329 = vmatmul.mubr.f32.gmra.mrb[0].mxu0 %v165
    %v330 = vpop.f32.mrb[0].mxu0
    %v331 = vadd.f32 %v90, %v330
    %v332 = vpop.f32.mrb[0].mxu0
    %333 = vmatprep.mubr.f32.mxu0 0.0
    %334 = vmatmul.mubr.f32.gmra.mrb[0].mxu0 %v168
    %v335 = vpop.f32.mrb[0].mxu0
    %v336 = vadd.f32 %v95, %v335
    %v337 = vpop.f32.mrb[0].mxu0
    %338 = vmatprep.mubr.f32.mxu0 0.0
    %339 = vmatmul.mubr.f32.gmra.mrb[0].mxu0 %v171
    %v340 = vpop.f32.mrb[0].mxu0
    %v341 = vadd.f32 %v100, %v340
    %v342 = vpop.f32.mrb[0].mxu0
    %343 = vmatprep.mubr.f32.mxu0 0.0
    %344 = vmatmul.mubr.f32.gmra.mrb[0].mxu0 %v174
    %v345 = vpop.f32.mrb[0].mxu0
    %v346 = vadd.f32 %v105, %v345
    %v347 = vpop.f32.mrb[0].mxu0
    %348 = vmatprep.mubr.f32.mxu0 0.0
    %349 = vmatmul.mubr.f32.gmra.mrb[0].mxu0 %v177
    %v350 = vpop.f32.mrb[0].mxu0
    %v351 = vadd.f32 %v110, %v350
    %v352 = vpop.f32.mrb[0].mxu0
    %353 = vmatprep.mubr.f32.mxu0 0.0
    %354 = vmatmul.mubr.f32.gmra.mrb[0].mxu0 %v180
    %v355 = vpop.f32.mrb[0].mxu0
    %v356 = vadd.f32 %v115, %v355
    %v357 = vpop.f32.mrb[0].mxu0
    %358 = vmatprep.mubr.f32.mxu0 0.0
    %359 = vmatmul.mubr.f32.gmra.mrb[0].mxu0 %v183
    %v360 = vpop.f32.mrb[0].mxu0
    %v361 = vadd.f32 %v120, %v360
    %v362 = vpop.f32.mrb[0].mxu0
    %363 = vmatprep.mubr.f32.mxu0 0.0
    %364 = vmatmul.mubr.f32.gmra.mrb[0].mxu0 %v186
    %v365 = vpop.f32.mrb[0].mxu0
    %v366 = vadd.f32 %v125, %v365
    %v367 = vpop.f32.mrb[0].mxu0
    %368 = vmatprep.mubr.f32.mxu0 0.0
    %369 = vmatmul.mubr.f32.gmra.mrb[0].mxu0 %v189
    %v370 = vpop.f32.mrb[0].mxu0
    %v371 = vadd.f32 %v130, %v370
    %v372 = vpop.f32.mrb[0].mxu0
    %373 = vmatprep.mubr.f32.mxu0 0.0
    %374 = vmatmul.mubr.f32.gmra.mrb[0].mxu0 %v192
    %v375 = vpop.f32.mrb[0].mxu0
    %v376 = vadd.f32 %v135, %v375
    %v377 = vpop.f32.mrb[0].mxu0
    %378 = vmatprep.mubr.f32.mxu0 0.0
    %379 = vmatmul.mubr.f32.gmra.mrb[0].mxu0 %v195
    %v380 = vpop.f32.mrb[0].mxu0
    %v381 = vadd.f32 %v140, %v380
    %v382 = vpop.f32.mrb[0].mxu0
    %383 = vmatprep.mubr.f32.mxu0 0.0
    %384 = vmatmul.mubr.f32.gmra.mrb[0].mxu0 %v198
    %v385 = vpop.f32.mrb[0].mxu0
    %v386 = vadd.f32 %v145, %v385
    %v387 = vpop.f32.mrb[0].mxu0
    %388 = vmatprep.mubr.f32.mxu0 0.0
    %389 = vmatmul.mubr.f32.gmra.mrb[0].mxu0 %v201
    %v390 = vpop.f32.mrb[0].mxu0
    %v391 = vadd.f32 %v150, %v390
    %v392 = vpop.f32.mrb[0].mxu0
    %393 = vmatprep.mubr.f32.mxu0 0.0
    %394 = vmatmul.mubr.f32.gmra.mrb[0].mxu0 %v204
    %v395 = vpop.f32.mrb[0].mxu0
    %v396 = vadd.f32 %v155, %v395
    %v397 = vpop.f32.mrb[0].mxu0
    %398 = vdwg.mxu0
    %v399 = vmax.f32 %v321, 0.0
    %v400 = vmax.f32 %v326, 0.0
    %v401 = vmax.f32 %v331, 0.0
    %v402 = vmax.f32 %v336, 0.0
    %v403 = vmax.f32 %v341, 0.0
    %v404 = vmax.f32 %v346, 0.0
    %v405 = vmax.f32 %v351, 0.0
    %v406 = vmax.f32 %v356, 0.0
    %v407 = vmax.f32 %v361, 0.0
    %v408 = vmax.f32 %v366, 0.0
    %v409 = vmax.f32 %v371, 0.0
    %v410 = vmax.f32 %v376, 0.0
    %v411 = vmax.f32 %v381, 0.0
    %v412 = vmax.f32 %v386, 0.0
    %v413 = vmax.f32 %v391, 0.0
    %v414 = vmax.f32 %v396, 0.0
    %v415 = vld [vmem:[%s3] sm:$0xff]
    %v416 = vld [vmem:[%s3 + $0x8] sm:$0xff]
    %v417 = vld [vmem:[%s3 + $0x10] sm:$0xff]
    %v418 = vld [vmem:[%s3 + $0x18] sm:$0xff]
    %v419 = vld [vmem:[%s3 + $0x20] sm:$0xff]
    %v420 = vld [vmem:[%s3 + $0x28] sm:$0xff]
    %v421 = vld [vmem:[%s3 + $0x30] sm:$0xff]
    %v422 = vld [vmem:[%s3 + $0x38] sm:$0xff]
    %v423 = vld [vmem:[%s4] sm:$0xff]
    %v424 = vld [vmem:[%s4 + $0x8] sm:$0xff]
    %v425 = vld [vmem:[%s4 + $0x10] sm:$0xff]
    %v426 = vld [vmem:[%s4 + $0x18] sm:$0xff]
    %v427 = vld [vmem:[%s4 + $0x20] sm:$0xff]
    %v428 = vld [vmem:[%s4 + $0x28] sm:$0xff]
    %v429 = vld [vmem:[%s4 + $0x30] sm:$0xff]
    %v430 = vld [vmem:[%s4 + $0x38] sm:$0xff]
    %432 = vset.pattern.permute.xlu0 0
    %433 = vperm.xlu0 %432, %v423
    %v434 = vpop.permute.xlu0 %433
    %437 = vset.pattern.permute.xlu0 0
    %438 = vperm.xlu0 %437, %v424
    %v439 = vpop.permute.xlu0 %438
    %442 = vset.pattern.permute.xlu0 0
    %443 = vperm.xlu0 %442, %v425
    %v444 = vpop.permute.xlu0 %443
    %447 = vset.pattern.permute.xlu0 0
    %448 = vperm.xlu0 %447, %v426
    %v449 = vpop.permute.xlu0 %448
    %452 = vset.pattern.permute.xlu0 0
    %453 = vperm.xlu0 %452, %v427
    %v454 = vpop.permute.xlu0 %453
    %457 = vset.pattern.permute.xlu0 0
    %458 = vperm.xlu0 %457, %v428
    %v459 = vpop.permute.xlu0 %458
    %462 = vset.pattern.permute.xlu0 0
    %463 = vperm.xlu0 %462, %v429
    %v464 = vpop.permute.xlu0 %463
    %467 = vset.pattern.permute.xlu0 0
    %468 = vperm.xlu0 %467, %v430
    %v469 = vpop.permute.xlu0 %468
    %471 = vmatprep.subr.mxu0 0.0
    %472 = vmatpush1.msra.mxu0 %v399
    %473 = vmatprep.subr.mxu0 0.0
    %474 = vmatpush1.msra.mxu0 %v400
    %475 = vmatprep.subr.mxu0 0.0
    %476 = vmatpush1.msra.mxu0 %v401
    %477 = vmatprep.subr.mxu0 0.0
    %478 = vmatpush1.msra.mxu0 %v402
    %479 = vmatprep.subr.mxu0 0.0
    %480 = vmatpush1.msra.mxu0 %v403
    %481 = vmatprep.subr.mxu0 0.0
    %482 = vmatpush1.msra.mxu0 %v404
    %483 = vmatprep.subr.mxu0 0.0
    %484 = vmatpush1.msra.mxu0 %v405
    %485 = vmatprep.subr.mxu0 0.0
    %486 = vmatpush1.msra.mxu0 %v406
    %487 = vmatprep.subr.mxu0 0.0
    %488 = vmatpush1.msra.mxu0 %v407
    %489 = vmatprep.subr.mxu0 0.0
    %490 = vmatpush1.msra.mxu0 %v408
    %491 = vmatprep.subr.mxu0 0.0
    %492 = vmatpush1.msra.mxu0 %v409
    %493 = vmatprep.subr.mxu0 0.0
    %494 = vmatpush1.msra.mxu0 %v410
    %495 = vmatprep.subr.mxu0 0.0
    %496 = vmatpush1.msra.mxu0 %v411
    %497 = vmatprep.subr.mxu0 0.0
    %498 = vmatpush1.msra.mxu0 %v412
    %499 = vmatprep.subr.mxu0 0.0
    %500 = vmatpush1.msra.mxu0 %v413
    %501 = vmatprep.subr.mxu0 0.0
    %502 = vmatpush1.msra.mxu0 %v414
    %503 = vmatprep.subr.mxu0 0.0
    %504 = vmatpush1.msra.mxu0 0.0
    %505 = vmatprep.subr.mxu0 0.0
    %506 = vmatpush1.msra.mxu0 0.0
    %507 = vmatprep.subr.mxu0 0.0
    %508 = vmatpush1.msra.mxu0 0.0
    %509 = vmatprep.subr.mxu0 0.0
    %510 = vmatpush1.msra.mxu0 0.0
    %511 = vmatprep.subr.mxu0 0.0
    %512 = vmatpush1.msra.mxu0 0.0
    %513 = vmatprep.subr.mxu0 0.0
    %514 = vmatpush1.msra.mxu0 0.0
    %515 = vmatprep.subr.mxu0 0.0
    %516 = vmatpush1.msra.mxu0 0.0
    %517 = vmatprep.subr.mxu0 0.0
    %518 = vmatpush1.msra.mxu0 0.0
    %519 = vmatprep.subr.mxu0 0.0
    %520 = vmatpush1.msra.mxu0 0.0
    %521 = vmatprep.subr.mxu0 0.0
    %522 = vmatpush1.msra.mxu0 0.0
    %523 = vmatprep.subr.mxu0 0.0
    %524 = vmatpush1.msra.mxu0 0.0
    %525 = vmatprep.subr.mxu0 0.0
    %526 = vmatpush1.msra.mxu0 0.0
    %527 = vmatprep.subr.mxu0 0.0
    %528 = vmatpush1.msra.mxu0 0.0
    %529 = vmatprep.subr.mxu0 0.0
    %530 = vmatpush1.msra.mxu0 0.0
    %531 = vmatprep.subr.mxu0 0.0
    %532 = vmatpush1.msra.mxu0 0.0
    %533 = vmatprep.subr.mxu0 0.0
    %534 = vmatpush1.msra.mxu0 0.0
    %535 = vmatprep.mubr.f32.mxu0 0.0
    %536 = vmatmul.mubr.f32.gmra.mrb[0].mxu0 %v415
    %v537 = vpop.f32.mrb[0].mxu0
    %v538 = vadd.f32 %v434, %v537
    %v539 = vpop.f32.mrb[0].mxu0
    %540 = vmatprep.mubr.f32.mxu0 0.0
    %541 = vmatmul.mubr.f32.gmra.mrb[0].mxu0 %v416
    %v542 = vpop.f32.mrb[0].mxu0
    %v543 = vadd.f32 %v439, %v542
    %v544 = vpop.f32.mrb[0].mxu0
    %545 = vmatprep.mubr.f32.mxu0 0.0
    %546 = vmatmul.mubr.f32.gmra.mrb[0].mxu0 %v417
    %v547 = vpop.f32.mrb[0].mxu0
    %v548 = vadd.f32 %v444, %v547
    %v549 = vpop.f32.mrb[0].mxu0
    %550 = vmatprep.mubr.f32.mxu0 0.0
    %551 = vmatmul.mubr.f32.gmra.mrb[0].mxu0 %v418
    %v552 = vpop.f32.mrb[0].mxu0
    %v553 = vadd.f32 %v449, %v552
    %v554 = vpop.f32.mrb[0].mxu0
    %555 = vmatprep.mubr.f32.mxu0 0.0
    %556 = vmatmul.mubr.f32.gmra.mrb[0].mxu0 %v419
    %v557 = vpop.f32.mrb[0].mxu0
    %v558 = vadd.f32 %v454, %v557
    %v559 = vpop.f32.mrb[0].mxu0
    %560 = vmatprep.mubr.f32.mxu0 0.0
    %561 = vmatmul.mubr.f32.gmra.mrb[0].mxu0 %v420
    %v562 = vpop.f32.mrb[0].mxu0
    %v563 = vadd.f32 %v459, %v562
    %v564 = vpop.f32.mrb[0].mxu0
    %565 = vmatprep.mubr.f32.mxu0 0.0
    %566 = vmatmul.mubr.f32.gmra.mrb[0].mxu0 %v421
    %v567 = vpop.f32.mrb[0].mxu0
    %v568 = vadd.f32 %v464, %v567
    %v569 = vpop.f32.mrb[0].mxu0
    %570 = vmatprep.mubr.f32.mxu0 0.0
    %571 = vmatmul.mubr.f32.gmra.mrb[0].mxu0 %v422
    %v572 = vpop.f32.mrb[0].mxu0
    %v573 = vadd.f32 %v469, %v572
    %v574 = vpop.f32.mrb[0].mxu0
    %575 = vdwg.mxu0
    %v576 = vmax.f32 %v538, 0.0
    %v577 = vmax.f32 %v543, 0.0
    %v578 = vmax.f32 %v548, 0.0
    %v579 = vmax.f32 %v553, 0.0
    %v580 = vmax.f32 %v558, 0.0
    %v581 = vmax.f32 %v563, 0.0
    %v582 = vmax.f32 %v568, 0.0
    %v583 = vmax.f32 %v573, 0.0
    %v584 = vld [vmem:[%s5] sm:$0x1]
    %v585 = vld [vmem:[#allocation2] sm:$0x1]
    %587 = vset.pattern.permute.xlu0 0
    %588 = vperm.xlu0 %587, %v585
    %v589 = vpop.permute.xlu0 %588
    %v591 = vlaneseq
    %v592 = vshrl.u32 %v591, 7
    %v593 = vsub.s32 0, %v592
    %v594 = vrot.slane %v589, %v593
    %vm595 = vcmask 523264
    %v597 = vsel %vm595, %v584, 0
    %599 = vmatprep.subr.mxu0 0.0
    %600 = vmatpush1.msra.mxu0 %v576
    %601 = vmatprep.subr.mxu0 0.0
    %602 = vmatpush1.msra.mxu0 %v577
    %603 = vmatprep.subr.mxu0 0.0
    %604 = vmatpush1.msra.mxu0 %v578
    %605 = vmatprep.subr.mxu0 0.0
    %606 = vmatpush1.msra.mxu0 %v579
    %607 = vmatprep.subr.mxu0 0.0
    %608 = vmatpush1.msra.mxu0 %v580
    %609 = vmatprep.subr.mxu0 0.0
    %610 = vmatpush1.msra.mxu0 %v581
    %611 = vmatprep.subr.mxu0 0.0
    %612 = vmatpush1.msra.mxu0 %v582
    %613 = vmatprep.subr.mxu0 0.0
    %614 = vmatpush1.msra.mxu0 %v583
    %615 = vmatprep.subr.mxu0 0.0
    %616 = vmatpush1.msra.mxu0 0.0
    %617 = vmatprep.subr.mxu0 0.0
    %618 = vmatpush1.msra.mxu0 0.0
    %619 = vmatprep.subr.mxu0 0.0
    %620 = vmatpush1.msra.mxu0 0.0
    %621 = vmatprep.subr.mxu0 0.0
    %622 = vmatpush1.msra.mxu0 0.0
    %623 = vmatprep.subr.mxu0 0.0
    %624 = vmatpush1.msra.mxu0 0.0
    %625 = vmatprep.subr.mxu0 0.0
    %626 = vmatpush1.msra.mxu0 0.0
    %627 = vmatprep.subr.mxu0 0.0
    %628 = vmatpush1.msra.mxu0 0.0
    %629 = vmatprep.subr.mxu0 0.0
    %630 = vmatpush1.msra.mxu0 0.0
    %631 = vmatprep.subr.mxu0 0.0
    %632 = vmatpush1.msra.mxu0 0.0
    %633 = vmatprep.subr.mxu0 0.0
    %634 = vmatpush1.msra.mxu0 0.0
    %635 = vmatprep.subr.mxu0 0.0
    %636 = vmatpush1.msra.mxu0 0.0
    %637 = vmatprep.subr.mxu0 0.0
    %638 = vmatpush1.msra.mxu0 0.0
    %639 = vmatprep.subr.mxu0 0.0
    %640 = vmatpush1.msra.mxu0 0.0
    %641 = vmatprep.subr.mxu0 0.0
    %642 = vmatpush1.msra.mxu0 0.0
    %643 = vmatprep.subr.mxu0 0.0
    %644 = vmatpush1.msra.mxu0 0.0
    %645 = vmatprep.subr.mxu0 0.0
    %646 = vmatpush1.msra.mxu0 0.0
    %647 = vmatprep.subr.mxu0 0.0
    %648 = vmatpush1.msra.mxu0 0.0
    %649 = vmatprep.subr.mxu0 0.0
    %650 = vmatpush1.msra.mxu0 0.0
    %651 = vmatprep.subr.mxu0 0.0
    %652 = vmatpush1.msra.mxu0 0.0
    %653 = vmatprep.subr.mxu0 0.0
    %654 = vmatpush1.msra.mxu0 0.0
    %655 = vmatprep.subr.mxu0 0.0
    %656 = vmatpush1.msra.mxu0 0.0
    %657 = vmatprep.subr.mxu0 0.0
    %658 = vmatpush1.msra.mxu0 0.0
    %659 = vmatprep.subr.mxu0 0.0
    %660 = vmatpush1.msra.mxu0 0.0
    %661 = vmatprep.subr.mxu0 0.0
    %662 = vmatpush1.msra.mxu0 0.0
    %663 = vmatprep.mubr.f32.mxu0 0.0
    %664 = vmatmul.mubr.f32.gmra.mrb[0].mxu0 %v597
    %v665 = vpop.f32.mrb[0].mxu0
    %v666 = vadd.f32 %v594, %v665
    %v667 = vpop.f32.mrb[0].mxu0
    %668 = vdwg.mxu0
    %669 = vst [vmem:[#allocation3] sm:$0x1] %v666
    // Predicated region
    $region30: #{tpu_custom_call.1} parent=1 // pred_check
      _
    $region31: #{tpu_custom_call.1} parent=1 // pred_check_branch
      %671 = sbr.rel (0) target = $region33
    $region32: #{tpu_custom_call.1} parent=1 // pred_region
      %s673 = ssub.s32 16, 16
      %674 = vsyncadd [#allocation4], %s673
      %s676 = sshll.u32 [#allocation3], 4
      %s677 = int_to_ptr.vmem [resolvable:$true] %s676
      %679 = dma.vmem_to_hbm [thread:$0]  %s677, 16, %s7, [#allocation4]
    $region33: #{tpu_custom_call.1} parent=1 // pred_fallthru
      _
    // Predicated region
    $region34: #{tpu_custom_call.1} parent=1 // pred_check
      _
    $region35: #{tpu_custom_call.1} parent=1 // pred_check_branch
      %681 = sbr.rel (0) target = $region37
    $region36: #{tpu_custom_call.1} parent=1 // pred_region
      %682 = dma.done [#allocation4], 16
    $region37: #{tpu_custom_call.1} parent=1 // pred_fallthru
      _
    %683 = vsyncpa [#allocation4], 1

</llo_original>
